<compile_context>
chip_gen: v5e
topology: v5e:2x2
jax: 0.10.0
libtpu: 0.0.40
codegen_flags: <defaults>
</compile_context>

<pallas_src>
import jax
import jax.numpy as jnp
from jax.experimental import pallas as pl
from jax.experimental.pallas import tpu as pltpu

HIDDEN_DIM = 32
INPUT_NUM = 5          # woEMO = False
HID_NUM = 3            # woEMO = False
INPUT_DIM = INPUT_NUM * HIDDEN_DIM   # 160
HID_DIM = HID_NUM * HIDDEN_DIM       # 96
OUT_DIM = HIDDEN_DIM                 # 32


def _round_up(x, n):
    return ((x + n - 1) // n) * n


def _choose_tm(m, tm_target=4096):
    """Pick the row tile.

    - >= 4 grid steps (2 per v7x TensorCore) once there is enough work,
      >= 2 for medium sizes, 1 step for tiny inputs (per-step overhead ~0.35us).
    - tm bucketed to a power of two in [8, tm_target] so distinct batch sizes
      reuse a small set of compilations.
    - tm does NOT need to divide m: the last block is ragged (masked writes).
    """
    if m >= 4096:
        min_steps = 4
    elif m >= 1024:
        min_steps = 2
    else:
        min_steps = 1
    cap = min(tm_target, max(8, m // min_steps))
    tm = 8
    while tm * 2 <= cap:
        tm *= 2
    return tm


def _mlp_kernel(x_ref, w1_ref, w2_ref, o_ref):
    # x_ref:  (tm, INPUT_DIM)  input-dtype tile of rows (f32 from HBM)
    # w1_ref: (INPUT_DIM, HID_DIM)  bf16 weight, resident across the grid
    # w2_ref: (HID_DIM, OUT_DIM)    bf16 weight, resident across the grid
    x = x_ref[...].astype(w1_ref.dtype)                               # cast in-kernel (VPU, hidden)
    h = jnp.dot(x, w1_ref[...], preferred_element_type=jnp.float32)   # MXU matmul 1 (f32 acc)
    h = jnp.maximum(h, 0.0)                                           # ReLU on f32 acc (VPU)
    y = jnp.dot(h.astype(w2_ref.dtype), w2_ref[...],
                preferred_element_type=jnp.float32)                   # MXU matmul 2 (f32 acc)
    o_ref[...] = y.astype(o_ref.dtype)


def mlp_pallas(x, w1_t, w2_t, *, tm_target=4096, compute_dtype=jnp.bfloat16,
               out_dtype=None):
    """x: [..., INPUT_DIM]; w1_t: [INPUT_DIM, HID_DIM]; w2_t: [HID_DIM, OUT_DIM].

    Weights are the transposed ([in, out]) form of PyTorch's [out, in] Linear
    weights. Matmuls use bf16 inputs with f32 MXU accumulation.
    """
    orig_shape = x.shape
    assert orig_shape[-1] == INPUT_DIM
    if out_dtype is None:
        out_dtype = x.dtype

    # No dtype cast and no pad on the x stream (both would add full HBM passes).
    x2 = x.reshape(-1, INPUT_DIM)
    m = x2.shape[0]

    # Weights are tiny (~18K elements): casting them here is negligible.
    w1c = w1_t.astype(compute_dtype)
    w2c = w2_t.astype(compute_dtype)

    tm = _choose_tm(m, tm_target)
    grid = (pl.cdiv(m, tm),)   # ragged last block: OOB reads feed only discarded rows

    x_bytes = jnp.dtype(x.dtype).itemsize
    o_bytes = jnp.dtype(out_dtype).itemsize
    c_bytes = jnp.dtype(compute_dtype).itemsize

    # VMEM budget from the chosen tm (lane padding: 160->256, 96/32->128 lanes).
    x_lanes, h_lanes, o_lanes = 256, 128, 128
    x_tile_b = tm * x_lanes * x_bytes
    o_tile_b = tm * o_lanes * o_bytes
    w_b = (INPUT_DIM * h_lanes + _round_up(HID_DIM, 8) * o_lanes) * c_bytes
    # in-kernel intermediates: bf16 x copy, f32 h, bf16 h, f32 y
    scratch_b = tm * (x_lanes * c_bytes + h_lanes * 4 + h_lanes * c_bytes + o_lanes * 4)
    vmem_need = 2 * (x_tile_b + o_tile_b) + 2 * w_b + scratch_b + (2 << 20)
    vmem_limit = int(min(max(vmem_need + vmem_need // 4, 16 << 20), 40 << 20))

    cost = pl.CostEstimate(
        flops=2 * m * (INPUT_DIM * HID_DIM + HID_DIM * OUT_DIM),
        transcendentals=0,
        bytes_accessed=(m * INPUT_DIM * x_bytes
                        + m * OUT_DIM * o_bytes
                        + (INPUT_DIM * HID_DIM + HID_DIM * OUT_DIM) * c_bytes),
    )

    out = pl.pallas_call(
        _mlp_kernel,
        out_shape=jax.ShapeDtypeStruct((m, OUT_DIM), out_dtype),
        grid_spec=pltpu.PrefetchScalarGridSpec(
            num_scalar_prefetch=0,
            grid=grid,
            in_specs=[
                pl.BlockSpec((tm, INPUT_DIM), lambda i: (i, 0)),
                pl.BlockSpec((INPUT_DIM, HID_DIM), lambda i: (0, 0)),
                pl.BlockSpec((HID_DIM, OUT_DIM), lambda i: (0, 0)),
            ],
            out_specs=pl.BlockSpec((tm, OUT_DIM), lambda i: (i, 0)),
        ),
        compiler_params=pltpu.CompilerParams(
            dimension_semantics=("parallel",),
            vmem_limit_bytes=vmem_limit,
        ),
        cost_estimate=cost,
    )(x2, w1c, w2c)

    return out.reshape(*orig_shape[:-1], OUT_DIM)


def init_params(key):
    """Deterministic weight init (mimics nn.Linear kaiming-uniform bound)."""
    k1, k2 = jax.random.split(key)
    bound1 = 1.0 / jnp.sqrt(INPUT_DIM)
    bound2 = 1.0 / jnp.sqrt(HID_DIM)
    # PyTorch stores Linear weight as [out, in]; we keep the transposed [in, out]
    # form so the kernel can do plain row-major matmuls.
    w1_t = jax.random.uniform(k1, (INPUT_DIM, HID_DIM), jnp.float32,
                              minval=-bound1, maxval=bound1)
    w2_t = jax.random.uniform(k2, (HID_DIM, OUT_DIM), jnp.float32,
                              minval=-bound2, maxval=bound2)
    return w1_t, w2_t


def _reference(x, w1_t, w2_t):
    # Same bf16-input / f32-accumulate math as the kernel.
    xb = x.astype(jnp.bfloat16)
    w1b = w1_t.astype(jnp.bfloat16)
    w2b = w2_t.astype(jnp.bfloat16)
    h = jnp.maximum(jnp.dot(xb, w1b, preferred_element_type=jnp.float32), 0.0)
    return jnp.dot(h.astype(jnp.bfloat16), w2b,
                   preferred_element_type=jnp.float32).astype(x.dtype)


if __name__ == "__main__":
    key = jax.random.PRNGKey(0)
    kx, kw, kr = jax.random.split(key, 3)

    w1_t, w2_t = init_params(kw)

    # Small shape consistent with the module: batch=2, seq=8, feature = 5*32.
    batch, seq = 2, 8
    x = jax.random.normal(kx, (batch, seq, INPUT_DIM), jnp.float32)
    out = mlp_pallas(x, w1_t, w2_t)
    jax.block_until_ready(out)
    assert out.shape == (batch, seq, OUT_DIM)
    ref = _reference(x, w1_t, w2_t)
    assert jnp.allclose(out, ref, atol=1e-2, rtol=1e-2), \
        float(jnp.max(jnp.abs(out - ref)))

    # Exercise the multi-step grid + ragged last block path (600 rows, tm=512).
    xr = jax.random.normal(kr, (600, INPUT_DIM), jnp.float32)
    outr = mlp_pallas(xr, w1_t, w2_t)
    jax.block_until_ready(outr)
    assert outr.shape == (600, OUT_DIM)
    refr = _reference(xr, w1_t, w2_t)
    assert jnp.allclose(outr, refr, atol=1e-2, rtol=1e-2), \
        float(jnp.max(jnp.abs(outr - refr)))

    print("KERNEL_OK")
</pallas_src>

<mosaic_0001>
module attributes {stable_mosaic.version = 11 : i64} {
  func.func @_mlp_kernel(%arg0: i32, %arg1: memref<16x160xf32, #tpu.memory_space<vmem>>, %arg2: memref<160x96xbf16, #tpu.memory_space<vmem>>, %arg3: memref<96x32xbf16, #tpu.memory_space<vmem>>, %arg4: memref<16x32xf32, #tpu.memory_space<vmem>>) attributes {dimension_semantics = [#tpu.dimension_semantics<parallel>], iteration_bounds = array<i64: 1>, scalar_prefetch = 0 : i64, scratch_operands = 0 : i64, tpu.core_type = #tpu.core_type<tc>, window_params = [{transform_indices = @transform_0, window_bounds = array<i64: 16, 160>}, {pipeline_mode = #tpu.pipeline_mode<synchronous>, transform_indices = @transform_1, window_bounds = array<i64: 160, 96>}, {pipeline_mode = #tpu.pipeline_mode<synchronous>, transform_indices = @transform_2, window_bounds = array<i64: 96, 32>}, {transform_indices = @transform_3, window_bounds = array<i64: 16, 32>}]} {
    %c0 = arith.constant 0 : index
    %c0_0 = arith.constant 0 : index
    %0 = vector.load %arg1[%c0, %c0_0] : memref<16x160xf32, #tpu.memory_space<vmem>>, vector<16x160xf32>
    %1 = arith.truncf %0 : vector<16x160xf32> to vector<16x160xbf16>
    %c0_1 = arith.constant 0 : index
    %c0_2 = arith.constant 0 : index
    %2 = vector.load %arg2[%c0_1, %c0_2] : memref<160x96xbf16, #tpu.memory_space<vmem>>, vector<160x96xbf16>
    %cst = arith.constant dense<0.000000e+00> : vector<16x96xf32>
    %3 = tpu.matmul %1, %2, %cst {dimension_numbers = #tpu.dot_dimension_numbers<[1], [0], [0], [1], [0, 0, 1, 1], [], []>} : vector<16x160xbf16>, vector<160x96xbf16>, vector<16x96xf32> -> vector<16x96xf32>
    %cst_3 = arith.constant 0.000000e+00 : f32
    %4 = vector.broadcast %cst_3 : f32 to vector<16x96xf32>
    %5 = arith.maximumf %3, %4 : vector<16x96xf32>
    %6 = arith.truncf %5 : vector<16x96xf32> to vector<16x96xbf16>
    %c0_4 = arith.constant 0 : index
    %c0_5 = arith.constant 0 : index
    %7 = vector.load %arg3[%c0_4, %c0_5] : memref<96x32xbf16, #tpu.memory_space<vmem>>, vector<96x32xbf16>
    %cst_6 = arith.constant dense<0.000000e+00> : vector<16x32xf32>
    %8 = tpu.matmul %6, %7, %cst_6 {dimension_numbers = #tpu.dot_dimension_numbers<[1], [0], [0], [1], [0, 0, 1, 1], [], []>} : vector<16x96xbf16>, vector<96x32xbf16>, vector<16x32xf32> -> vector<16x32xf32>
    %c0_7 = arith.constant 0 : index
    %c0_8 = arith.constant 0 : index
    %9 = vector.load %arg4[%c0_7, %c0_8] : memref<16x32xf32, #tpu.memory_space<vmem>>, vector<16x32xf32>
    tpu.vector_store %arg4[%c0_7, %c0_8], %8 {strides = array<i32>} : memref<16x32xf32, #tpu.memory_space<vmem>>, vector<16x32xf32>,
    return
  }
  func.func @transform_0(%arg0: i32) -> (i32, i32) {
    %c0_i32 = arith.constant 0 : i32
    %c0_i32_0 = arith.constant 0 : i32
    return %arg0, %c0_i32 : i32, i32
  }
  func.func @transform_1(%arg0: i32) -> (i32, i32) {
    %c0_i32 = arith.constant 0 : i32
    %c0_i32_0 = arith.constant 0 : i32
    %c0_i32_1 = arith.constant 0 : i32
    return %c0_i32, %c0_i32_0 : i32, i32
  }
  func.func @transform_2(%arg0: i32) -> (i32, i32) {
    %c0_i32 = arith.constant 0 : i32
    %c0_i32_0 = arith.constant 0 : i32
    %c0_i32_1 = arith.constant 0 : i32
    return %c0_i32, %c0_i32_0 : i32, i32
  }
  func.func @transform_3(%arg0: i32) -> (i32, i32) {
    %c0_i32 = arith.constant 0 : i32
    %c0_i32_0 = arith.constant 0 : i32
    return %arg0, %c0_i32 : i32, i32
  }
}

</mosaic_0001>

<llo_original>
// kernel: tpu_custom_call.1
$region0: #{tpu_custom_call.1}
  #allocation0 [shape = 'u32[]', space=smem, size = 0x4, offset = 0x4, fixed_abs, tag = 'smem constant byte address 0x4 - core index']
  #allocation1 [shape = 'u32[72,128]{1,0:T(1,128)}', space=vmem, size = 0x9000, scoped, tag = 'internal scratch']
  %s0 = inlined_call_operand.vmem [shape: f32[16,160], index: 0, kind: input, shape index: {}]
  %s1 = inlined_call_operand.hbm [shape: bf16[160,96], index: 1, kind: input, shape index: {}]
  %s2 = inlined_call_operand.vmem [shape: bf16[96,32], index: 2, kind: input, shape index: {}]
  %s3 = inlined_call_operand.hbm [shape: f32[16,32], index: 3, kind: output, shape index: {}]
  %s4 = sld [smem:[#allocation0]]
  $region26: #{tpu_custom_call.1} parent=0
    _
  %s6 = ssub.s32 1, %s4
  %s7 = scalar_select 0, %s6, %s4
  $region1: #{tpu_custom_call.1} parent=0
    #allocation2 [shape = 'u8[40960]{0}', space=vmem, size = 0xa000, scoped, tag = 'input window, operand 1, single buffered']
    #allocation3 [shape = 's32[1]{0}', space=sflag, size = 0x4, scoped, tag = 'scoped memory for tpu_custom_call.1']
    #allocation4 [shape = 's32[1]{0}', space=sflag, size = 0x4, scoped, tag = 'scoped memory for tpu_custom_call.1']
    #allocation5 [shape = 'u8[8192]{0}', space=vmem, size = 0x2000, scoped, tag = 'output window, operand 0, single buffered']
    %8 = vsyncpa [#allocation3], 0
    %9 = vsyncpa [#allocation4], 0
    // Predicated region
    $region2: #{tpu_custom_call.1} parent=1 // pred_check
      _
    $region3: #{tpu_custom_call.1} parent=1 // pred_check_branch
      %11 = sbr.rel (0) target = $region5
    $region4: #{tpu_custom_call.1} parent=1 // pred_region
      _
    $region5: #{tpu_custom_call.1} parent=1 // pred_fallthru
      _
    // Predicated region
    $region6: #{tpu_custom_call.1} parent=1 // pred_check
      _
    $region7: #{tpu_custom_call.1} parent=1 // pred_check_branch
      %13 = sbr.rel (0) target = $region9
    $region8: #{tpu_custom_call.1} parent=1 // pred_region
      %15 = vsyncadd [#allocation3], 0
      %s16 = sshll.u32 %s1, 4
      %s17 = int_to_ptr.hbm [resolvable:$true] %s16
      %s18 = sshll.u32 [#allocation2], 4
      %s19 = int_to_ptr.vmem [resolvable:$true] %s18
      %24 = dma.hbm_to_vmem [thread:$0]  %s17, 1280, %s19, [#allocation3], 64, 64, 4
    $region9: #{tpu_custom_call.1} parent=1 // pred_fallthru
      _
    // Predicated region
    $region10: #{tpu_custom_call.1} parent=1 // pred_check
      _
    $region11: #{tpu_custom_call.1} parent=1 // pred_check_branch
      %26 = sbr.rel (0) target = $region13
    $region12: #{tpu_custom_call.1} parent=1 // pred_region
      _
    $region13: #{tpu_custom_call.1} parent=1 // pred_fallthru
      _
    // Predicated region
    $region14: #{tpu_custom_call.1} parent=1 // pred_check
      _
    $region15: #{tpu_custom_call.1} parent=1 // pred_check_branch
      %28 = sbr.rel (0) target = $region17
    $region16: #{tpu_custom_call.1} parent=1 // pred_region
      %30 = dma.done [#allocation3], 1280
    $region17: #{tpu_custom_call.1} parent=1 // pred_fallthru
      _
    %v32 = vld [vmem:[%s0] sm:$0xff]
    %v33 = vld [vmem:[%s0 + $0x8] sm:$0xff]
    %v34 = vld [vmem:[%s0 + $0x10] sm:$0xff]
    %v35 = vld [vmem:[%s0 + $0x18] sm:$0xff]
    %v36 = vpack.c.bf16 %v34, %v32
    %v37 = vpack.c.bf16 %v35, %v33
    %v38 = vld [vmem:[#allocation2] sm:$0xf]
    %v39 = vld [vmem:[#allocation2 + $0x4] sm:$0xf]
    %v40 = vld [vmem:[#allocation2 + $0x8] sm:$0xf]
    %v41 = vld [vmem:[#allocation2 + $0xc] sm:$0xf]
    %v42 = vld [vmem:[#allocation2 + $0x10] sm:$0xf]
    %v43 = vld [vmem:[#allocation2 + $0x14] sm:$0xf]
    %v44 = vld [vmem:[#allocation2 + $0x18] sm:$0xf]
    %v45 = vld [vmem:[#allocation2 + $0x1c] sm:$0xf]
    %v46 = vld [vmem:[#allocation2 + $0x20] sm:$0xf]
    %v47 = vld [vmem:[#allocation2 + $0x24] sm:$0xf]
    %v48 = vld [vmem:[#allocation2 + $0x28] sm:$0xf]
    %v49 = vld [vmem:[#allocation2 + $0x2c] sm:$0xf]
    %v50 = vld [vmem:[#allocation2 + $0x30] sm:$0xf]
    %v51 = vld [vmem:[#allocation2 + $0x34] sm:$0xf]
    %v52 = vld [vmem:[#allocation2 + $0x38] sm:$0xf]
    %v53 = vld [vmem:[#allocation2 + $0x3c] sm:$0xf]
    %v54 = vld [vmem:[#allocation2 + $0x40] sm:$0xf]
    %v55 = vld [vmem:[#allocation2 + $0x44] sm:$0xf]
    %v56 = vld [vmem:[#allocation2 + $0x48] sm:$0xf]
    %v57 = vld [vmem:[#allocation2 + $0x4c] sm:$0xf]
    %v78 = vunpack.c.l.b16 %v38
    %v79 = vunpack.c.l.b16 %v39
    %v80 = vunpack.c.l.b16 %v40
    %v81 = vunpack.c.l.b16 %v41
    %v82 = vunpack.c.l.b16 %v42
    %v83 = vunpack.c.l.b16 %v43
    %v84 = vunpack.c.l.b16 %v44
    %v85 = vunpack.c.l.b16 %v45
    %v86 = vunpack.c.l.b16 %v46
    %v87 = vunpack.c.l.b16 %v47
    %v88 = vunpack.c.l.b16 %v48
    %v89 = vunpack.c.l.b16 %v49
    %v90 = vunpack.c.l.b16 %v50
    %v91 = vunpack.c.l.b16 %v51
    %v92 = vunpack.c.l.b16 %v52
    %v93 = vunpack.c.l.b16 %v53
    %v94 = vunpack.c.l.b16 %v54
    %v95 = vunpack.c.l.b16 %v55
    %v96 = vunpack.c.l.b16 %v56
    %v97 = vunpack.c.l.b16 %v57
    %v98 = vpack.c.b16 %v79, %v78
    %v99 = vpack.c.b16 %v81, %v80
    %v100 = vpack.c.b16 %v83, %v82
    %v101 = vpack.c.b16 %v85, %v84
    %v102 = vpack.c.b16 %v87, %v86
    %v103 = vpack.c.b16 %v89, %v88
    %v104 = vpack.c.b16 %v91, %v90
    %v105 = vpack.c.b16 %v93, %v92
    %v106 = vpack.c.b16 %v95, %v94
    %v107 = vpack.c.b16 %v97, %v96
    %vm118 = vcmask 261120
    %v120 = vsel %vm118, %v37, 0
    %122 = vmatpush.bf16.msra.mxu0 %v105
    %123 = vmatpush.bf16.msra.mxu0 %v104
    %124 = vmatpush.bf16.msra.mxu0 %v103
    %125 = vmatpush.bf16.msra.mxu0 %v102
    %126 = vmatpush.bf16.msra.mxu0 %v101
    %127 = vmatpush.bf16.msra.mxu0 %v100
    %128 = vmatpush.bf16.msra.mxu0 %v99
    %129 = vmatpush.bf16.msra.mxu0 %v98
    %130 = vmatmul.bf16.gmra.mxu0 %v36
    %v131 = vpop.f32.mrf.mxu0
    %v132 = vadd.f32 0.0, %v131
    %v133 = vpop.f32.mrf.mxu0
    %v134 = vadd.f32 0.0, %v133
    %135 = vdwg.mxu0
    %136 = vmatpush.bf16.msra.mxu0 0
    %137 = vmatpush.bf16.msra.mxu0 0
    %138 = vmatpush.bf16.msra.mxu0 0
    %139 = vmatpush.bf16.msra.mxu0 0
    %140 = vmatpush.bf16.msra.mxu0 0
    %141 = vmatpush.bf16.msra.mxu0 0
    %142 = vmatpush.bf16.msra.mxu0 %v107
    %143 = vmatpush.bf16.msra.mxu0 %v106
    %144 = vmatmul.bf16.gmra.mxu0 %v120
    %v145 = vpop.f32.mrf.mxu0
    %v146 = vadd.f32 %v132, %v145
    %v147 = vpop.f32.mrf.mxu0
    %v148 = vadd.f32 %v134, %v147
    %149 = vdwg.mxu0
    %v150 = vmax.f32 %v146, 0.0
    %v151 = vmax.f32 %v148, 0.0
    %v152 = vpack.c.bf16 %v151, %v150
    %v153 = vld [vmem:[%s2] sm:$0xf]
    %v154 = vld [vmem:[%s2 + $0x4] sm:$0xf]
    %v155 = vld [vmem:[%s2 + $0x8] sm:$0xf]
    %v156 = vld [vmem:[%s2 + $0xc] sm:$0xf]
    %v157 = vld [vmem:[%s2 + $0x10] sm:$0xf]
    %v158 = vld [vmem:[%s2 + $0x14] sm:$0xf]
    %v159 = vld [vmem:[%s2 + $0x18] sm:$0xf]
    %v160 = vld [vmem:[%s2 + $0x1c] sm:$0xf]
    %v161 = vld [vmem:[%s2 + $0x20] sm:$0xf]
    %v162 = vld [vmem:[%s2 + $0x24] sm:$0xf]
    %v163 = vld [vmem:[%s2 + $0x28] sm:$0xf]
    %v164 = vld [vmem:[%s2 + $0x2c] sm:$0xf]
    %v177 = vunpack.c.l.b16 %v153
    %v178 = vunpack.c.l.b16 %v154
    %v179 = vunpack.c.l.b16 %v155
    %v180 = vunpack.c.l.b16 %v156
    %v181 = vunpack.c.l.b16 %v157
    %v182 = vunpack.c.l.b16 %v158
    %v183 = vunpack.c.l.b16 %v159
    %v184 = vunpack.c.l.b16 %v160
    %v185 = vunpack.c.l.b16 %v161
    %v186 = vunpack.c.l.b16 %v162
    %v187 = vunpack.c.l.b16 %v163
    %v188 = vunpack.c.l.b16 %v164
    %v189 = vpack.c.b16 %v178, %v177
    %v190 = vpack.c.b16 %v180, %v179
    %v191 = vpack.c.b16 %v182, %v181
    %v192 = vpack.c.b16 %v184, %v183
    %v193 = vpack.c.b16 %v186, %v185
    %v194 = vpack.c.b16 %v188, %v187
    %vm201 = vcmask 785408
    %v203 = vsel %vm201, %v152, 0
    %205 = vmatpush.bf16.msra.mxu0 0
    %206 = vmatpush.bf16.msra.mxu0 0
    %207 = vmatpush.bf16.msra.mxu0 %v194
    %208 = vmatpush.bf16.msra.mxu0 %v193
    %209 = vmatpush.bf16.msra.mxu0 %v192
    %210 = vmatpush.bf16.msra.mxu0 %v191
    %211 = vmatpush.bf16.msra.mxu0 %v190
    %212 = vmatpush.bf16.msra.mxu0 %v189
    %213 = vmatmul.bf16.gmra.mxu0 %v203
    %v214 = vpop.f32.mrf.mxu0
    %v215 = vadd.f32 0.0, %v214
    %v216 = vpop.f32.mrf.mxu0
    %v217 = vadd.f32 0.0, %v216
    %218 = vdwg.mxu0
    %219 = vst.msk [vmem:[#allocation5] sm:$0xff] %vm118, %v215
    %220 = vst.msk [vmem:[#allocation5 + $0x8] sm:$0xff] %vm118, %v217
    // Predicated region
    $region18: #{tpu_custom_call.1} parent=1 // pred_check
      _
    $region19: #{tpu_custom_call.1} parent=1 // pred_check_branch
      %222 = sbr.rel (0) target = $region21
    $region20: #{tpu_custom_call.1} parent=1 // pred_region
      %224 = vsyncadd [#allocation4], 0
      %s225 = sshll.u32 [#allocation5], 4
      %s226 = int_to_ptr.vmem [resolvable:$true] %s225
      %s227 = sshll.u32 %s3, 4
      %s228 = int_to_ptr.hbm [resolvable:$true] %s227
      %233 = dma.vmem_to_hbm [thread:$0]  %s226, 256, %s228, [#allocation4], 128, 128, 8
    $region21: #{tpu_custom_call.1} parent=1 // pred_fallthru
      _
    // Predicated region
    $region22: #{tpu_custom_call.1} parent=1 // pred_check
      _
    $region23: #{tpu_custom_call.1} parent=1 // pred_check_branch
      %235 = sbr.rel (0) target = $region25
    $region24: #{tpu_custom_call.1} parent=1 // pred_region
      %237 = dma.done [#allocation4], 256
    $region25: #{tpu_custom_call.1} parent=1 // pred_fallthru
      _
    %238 = vsyncpa [#allocation3], 1
    %239 = vsyncpa [#allocation4], 1

</llo_original>
